<compile_context>
chip_gen: v7x
topology: tpu7x:2x2x1
jax: 0.10.0
libtpu: 0.0.40
codegen_flags: <defaults>
</compile_context>

<pallas_src>
import math

import jax
import jax.numpy as jnp
import numpy as np
from jax.experimental import pallas as pl
from jax.experimental.pallas import tpu as pltpu


_VMEM_DATA_BUDGET = 24 << 20   # bytes of double-buffered tile data per grid step
_VMEM_LIMIT_BYTES = 40 << 20   # scoped VMEM limit (fits v7x's 64 MiB physical)
_MAX_TILE_M = 4096             # amortize ~0.35us/step overhead on narrow dims


def _round_up(n, mult):
    return ((n + mult - 1) // mult) * mult


def _cdiv(a, b):
    return (a + b - 1) // b


def _choose_tile_m(m, dim):
    """Row-tile size from a VMEM budget; >=2 grid steps when m > 8 (megacore)."""
    if m <= 8:
        return m                                   # single full block (always legal)
    budget_rows = max(8, ((_VMEM_DATA_BUDGET // (24 * dim)) // 8) * 8)
    half_rows = _round_up(_cdiv(m, 2), 8)          # ensure grid >= 2 for v7x's 2 TCs
    return max(8, min(budget_rows, _MAX_TILE_M, half_rows))


def _nf_ggd_kernel(params_ref, s_ref, b_ref, x_ref, z_ref, lp_ref):
    """Fused flow chain (pre-folded affine) + GenNormal.log_prob.

    params_ref : SMEM (3,) f32 -> [loc, inv_two_var, neg_norm_const]
    s_ref      : VMEM (1, D)   -> effective scale  exp(sum_k log_s_k)
    b_ref      : VMEM (1, D)   -> effective shift
    x_ref      : VMEM (Tm, D)  -> input batch tile
    z_ref      : VMEM (Tm, D)  -> transformed samples
    lp_ref     : VMEM (Tm, D)  -> prior log-prob (elementwise)
    """
    loc = params_ref[0]
    inv_two_var = params_ref[1]
    neg_norm = params_ref[2]          # -(log(scale) + 0.5*log(2*pi))

    z = x_ref[...] * s_ref[...] + b_ref[...]
    z_ref[...] = z.astype(z_ref.dtype)

    d = z - loc
    lp_ref[...] = (-(d * d) * inv_two_var + neg_norm).astype(lp_ref.dtype)


def normalizing_flow_ggd_forward(x, log_s, b, loc, scale, p, *,
                                 out_dtype=jnp.float32, donate_x=False):
    """Returns (z, prior_logprob, log_det) matching NormalizingFlowModelGGD.forward.

    `p` is accepted but unused in log_prob, matching the reference GenNormal.log_prob.
    Set out_dtype=jnp.bfloat16 to halve output HBM traffic if downstream tolerates it.
    """
    x = x.astype(jnp.float32)
    log_s = jnp.asarray(log_s, jnp.float32)
    b = jnp.asarray(b, jnp.float32)

    m, dim = x.shape

    # ---- fold the K elementwise-affine flows (wrapper-side, tiny work) --------
    #   z = x * s_eff + b_eff
    #   s_eff = exp(sum_k log_s_k)
    #   b_eff = sum_k b_k * exp(sum_{j>k} log_s_j)
    log_s_sum = jnp.sum(log_s, axis=0)                               # (dim,)
    s_eff = jnp.exp(log_s_sum)
    suffix_excl = jnp.concatenate(
        [jnp.cumsum(log_s[::-1], axis=0)[::-1][1:],
         jnp.zeros((1, dim), jnp.float32)], axis=0)                  # (K, dim)
    b_eff = jnp.sum(b * jnp.exp(suffix_excl), axis=0)                # (dim,)

    # log_det is identical for every row (elementwise flows, shared (dim,) params)
    log_det = jnp.full((m,), jnp.sum(log_s), dtype=jnp.float32)

    # ---- Normal log-prob constants --------------------------------------------
    scale_f = jnp.float32(scale)
    inv_two_var = 1.0 / (2.0 * scale_f * scale_f)
    neg_norm = -(jnp.log(scale_f) + jnp.float32(0.5 * math.log(2.0 * math.pi)))
    params = jnp.stack([jnp.float32(loc), inv_two_var, neg_norm])

    # ---- tiling: no padding, ragged tail handled by a partial last block ------
    tile_m = _choose_tile_m(m, dim)
    grid = (_cdiv(m, tile_m),)

    s2 = s_eff.reshape(1, dim)
    b2 = b_eff.reshape(1, dim)

    extra_kwargs = {}
    if donate_x and out_dtype == x.dtype:
        extra_kwargs["input_output_aliases"] = {3: 0}   # reuse x's HBM buffer for z

    z, prior_logprob = pl.pallas_call(
        _nf_ggd_kernel,
        out_shape=(
            jax.ShapeDtypeStruct((m, dim), out_dtype),
            jax.ShapeDtypeStruct((m, dim), out_dtype),
        ),
        grid=grid,
        in_specs=[
            pl.BlockSpec(memory_space=pltpu.MemorySpace.SMEM),     # params (scalars)
            pl.BlockSpec((1, dim), lambda i: (0, 0)),              # s_eff (resident)
            pl.BlockSpec((1, dim), lambda i: (0, 0)),              # b_eff (resident)
            pl.BlockSpec((tile_m, dim), lambda i: (i, 0)),         # x tile
        ],
        out_specs=(
            pl.BlockSpec((tile_m, dim), lambda i: (i, 0)),         # z tile
            pl.BlockSpec((tile_m, dim), lambda i: (i, 0)),         # log_prob tile
        ),
        compiler_params=pltpu.CompilerParams(
            dimension_semantics=("parallel",),                     # megacore on v7x
            vmem_limit_bytes=_VMEM_LIMIT_BYTES,
        ),
        cost_estimate=pl.CostEstimate(
            flops=6 * m * dim,
            transcendentals=0,
            bytes_accessed=12 * m * dim,
        ),
        **extra_kwargs,
    )(params, s2, b2, x)

    return z, prior_logprob, log_det


def _reference_forward(x, log_s, b, loc, scale, p):
    """Plain-JAX reference mirroring the PyTorch forward (per-flow loop, no fusion)."""
    K = log_s.shape[0]
    m, _ = x.shape
    log_det = jnp.zeros((m,), jnp.float32)
    for k in range(K):
        x = x * jnp.exp(log_s[k]) + b[k]
        log_det = log_det + jnp.sum(log_s[k])
    var = scale * scale
    lp = (
        -(x - loc) ** 2 / (2.0 * var)
        - jnp.log(jnp.float32(scale))
        - math.log(math.sqrt(2.0 * math.pi))
    )
    return x, lp, log_det


if __name__ == "__main__":
    # Small deterministic problem: batch m=8, feature dim=16, K=4 flows.
    m, dim, K = 8, 16, 4
    key = jax.random.PRNGKey(0)
    kx, ks, kb = jax.random.split(key, 3)

    x = jax.random.normal(kx, (m, dim), dtype=jnp.float32)
    log_s = 0.1 * jax.random.normal(ks, (K, dim), dtype=jnp.float32)
    b = 0.05 * jax.random.normal(kb, (K, dim), dtype=jnp.float32)

    # Module __init__: loc/scale/p are scalar parameters (zeros + value).
    loc, scale, p = 0.0, 1.0, 2.0

    z, prior_logprob, log_det = normalizing_flow_ggd_forward(x, log_s, b, loc, scale, p)
    jax.block_until_ready((z, prior_logprob, log_det))

    z_r, lp_r, ld_r = _reference_forward(x, log_s, b, loc, scale, p)
    np.testing.assert_allclose(np.asarray(z), np.asarray(z_r), rtol=1e-5, atol=1e-5)
    np.testing.assert_allclose(np.asarray(prior_logprob), np.asarray(lp_r), rtol=1e-5, atol=1e-5)
    np.testing.assert_allclose(np.asarray(log_det), np.asarray(ld_r), rtol=1e-5, atol=1e-5)

    print("KERNEL_OK")
</pallas_src>

<mosaic_0001>
module attributes {stable_mosaic.version = 11 : i64} {
  func.func @_nf_ggd_kernel(%arg0: i32, %arg1: memref<3xf32, #tpu.memory_space<smem>>, %arg2: memref<1x16xf32, #tpu.memory_space<vmem>>, %arg3: memref<1x16xf32, #tpu.memory_space<vmem>>, %arg4: memref<8x16xf32, #tpu.memory_space<vmem>>, %arg5: memref<8x16xf32, #tpu.memory_space<vmem>>, %arg6: memref<8x16xf32, #tpu.memory_space<vmem>>) attributes {dimension_semantics = [#tpu.dimension_semantics<parallel>], iteration_bounds = array<i64: 1>, scalar_prefetch = 0 : i64, scratch_operands = 0 : i64, tpu.core_type = #tpu.core_type<tc>, window_params = [{transform_indices = @transform_0, window_bounds = array<i64: 3>}, {pipeline_mode = #tpu.pipeline_mode<synchronous>, transform_indices = @transform_1, window_bounds = array<i64: 1, 16>}, {pipeline_mode = #tpu.pipeline_mode<synchronous>, transform_indices = @transform_2, window_bounds = array<i64: 1, 16>}, {transform_indices = @transform_3, window_bounds = array<i64: 8, 16>}, {transform_indices = @transform_4, window_bounds = array<i64: 8, 16>}, {transform_indices = @transform_5, window_bounds = array<i64: 8, 16>}]} {
    %c0 = arith.constant 0 : index
    %0 = memref.load %arg1[%c0] : memref<3xf32, #tpu.memory_space<smem>>
    %c1 = arith.constant 1 : index
    %1 = memref.load %arg1[%c1] : memref<3xf32, #tpu.memory_space<smem>>
    %c2 = arith.constant 2 : index
    %2 = memref.load %arg1[%c2] : memref<3xf32, #tpu.memory_space<smem>>
    %c0_0 = arith.constant 0 : index
    %c0_1 = arith.constant 0 : index
    %3 = vector.load %arg4[%c0_0, %c0_1] : memref<8x16xf32, #tpu.memory_space<vmem>>, vector<8x16xf32>
    %c0_2 = arith.constant 0 : index
    %c0_3 = arith.constant 0 : index
    %4 = vector.load %arg2[%c0_2, %c0_3] : memref<1x16xf32, #tpu.memory_space<vmem>>, vector<1x16xf32>
    %5 = vector.broadcast %4 : vector<1x16xf32> to vector<8x16xf32>
    %6 = arith.mulf %3, %5 : vector<8x16xf32>
    %c0_4 = arith.constant 0 : index
    %c0_5 = arith.constant 0 : index
    %7 = vector.load %arg3[%c0_4, %c0_5] : memref<1x16xf32, #tpu.memory_space<vmem>>, vector<1x16xf32>
    %8 = vector.broadcast %7 : vector<1x16xf32> to vector<8x16xf32>
    %9 = arith.addf %6, %8 : vector<8x16xf32>
    %c0_6 = arith.constant 0 : index
    %c0_7 = arith.constant 0 : index
    %10 = vector.load %arg5[%c0_6, %c0_7] : memref<8x16xf32, #tpu.memory_space<vmem>>, vector<8x16xf32>
    tpu.vector_store %arg5[%c0_6, %c0_7], %9 {strides = array<i32>} : memref<8x16xf32, #tpu.memory_space<vmem>>, vector<8x16xf32>,
    %11 = vector.broadcast %0 : f32 to vector<8x16xf32>
    %12 = arith.subf %9, %11 : vector<8x16xf32>
    %13 = arith.mulf %12, %12 : vector<8x16xf32>
    %cst = arith.constant 0.000000e+00 : f32
    %14 = vector.broadcast %cst : f32 to vector<8x16xf32>
    %15 = arith.subf %14, %13 : vector<8x16xf32>
    %16 = vector.broadcast %1 : f32 to vector<8x16xf32>
    %17 = arith.mulf %15, %16 : vector<8x16xf32>
    %18 = vector.broadcast %2 : f32 to vector<8x16xf32>
    %19 = arith.addf %17, %18 : vector<8x16xf32>
    %c0_8 = arith.constant 0 : index
    %c0_9 = arith.constant 0 : index
    %20 = vector.load %arg6[%c0_8, %c0_9] : memref<8x16xf32, #tpu.memory_space<vmem>>, vector<8x16xf32>
    tpu.vector_store %arg6[%c0_8, %c0_9], %19 {strides = array<i32>} : memref<8x16xf32, #tpu.memory_space<vmem>>, vector<8x16xf32>,
    return
  }
  func.func @transform_0(%arg0: i32) -> i32 {
    %c0_i32 = arith.constant 0 : i32
    %c0_i32_0 = arith.constant 0 : i32
    return %c0_i32 : i32
  }
  func.func @transform_1(%arg0: i32) -> (i32, i32) {
    %c0_i32 = arith.constant 0 : i32
    %c0_i32_0 = arith.constant 0 : i32
    %c0_i32_1 = arith.constant 0 : i32
    return %c0_i32, %c0_i32_0 : i32, i32
  }
  func.func @transform_2(%arg0: i32) -> (i32, i32) {
    %c0_i32 = arith.constant 0 : i32
    %c0_i32_0 = arith.constant 0 : i32
    %c0_i32_1 = arith.constant 0 : i32
    return %c0_i32, %c0_i32_0 : i32, i32
  }
  func.func @transform_3(%arg0: i32) -> (i32, i32) {
    %c0_i32 = arith.constant 0 : i32
    %c0_i32_0 = arith.constant 0 : i32
    return %arg0, %c0_i32 : i32, i32
  }
  func.func @transform_4(%arg0: i32) -> (i32, i32) {
    %c0_i32 = arith.constant 0 : i32
    %c0_i32_0 = arith.constant 0 : i32
    return %arg0, %c0_i32 : i32, i32
  }
  func.func @transform_5(%arg0: i32) -> (i32, i32) {
    %c0_i32 = arith.constant 0 : i32
    %c0_i32_0 = arith.constant 0 : i32
    return %arg0, %c0_i32 : i32, i32
  }
}

</mosaic_0001>

<llo_original>
// kernel: tpu_custom_call.1
$region0: #{tpu_custom_call.1}
  #allocation0 [shape = 'u32[]', space=smem, size = 0x4, offset = 0x4, fixed_abs, tag = 'smem constant byte address 0x4 - core index']
  #allocation1 [shape = 'u32[144,128]{1,0:T(1,128)}', space=vmem, size = 0x12000, scoped, tag = 'internal scratch']
  %s0 = inlined_call_operand.hbm [shape: f32[3], index: 0, kind: input, shape index: {}]
  %s1 = inlined_call_operand.vmem [shape: f32[1,16], index: 1, kind: input, shape index: {}]
  %s2 = inlined_call_operand.vmem [shape: f32[1,16], index: 2, kind: input, shape index: {}]
  %s3 = inlined_call_operand.vmem [shape: f32[8,16], index: 3, kind: input, shape index: {}]
  %s4 = inlined_call_operand.hbm [shape: f32[8,16], index: 4, kind: output, shape index: {0}]
  %s5 = inlined_call_operand.hbm [shape: f32[8,16], index: 5, kind: output, shape index: {1}]
  %6 = xla_tuple %s4, %s5
  %s7 = sld [smem:[#allocation0]]
  $region38: #{tpu_custom_call.1} parent=0
    _
  %s9 = ssub.s32 1, %s7
  %s10 = scalar_select 0, %s9, %s7
  $region1: #{tpu_custom_call.1} parent=0
    #allocation2 [shape = 'u8[512]{0}', space=smem, size = 0x200, scoped, tag = 'input window, operand 0, single buffered']
    #allocation3 [shape = 's32[1]{0}', space=sflag, size = 0x4, scoped, tag = 'scoped memory for tpu_custom_call.1']
    #allocation4 [shape = 's32[1]{0}', space=sflag, size = 0x4, scoped, tag = 'scoped memory for tpu_custom_call.1']
    #allocation5 [shape = 'u8[4096]{0}', space=vmem, size = 0x1000, scoped, tag = 'output window, operand 0, single buffered']
    #allocation6 [shape = 'u8[4096]{0}', space=vmem, size = 0x1000, scoped, tag = 'output window, operand 1, single buffered']
    #allocation7 [shape = 's32[1]{0}', space=sflag, size = 0x4, scoped, tag = 'scoped memory for tpu_custom_call.1']
    %11 = vsyncpa [#allocation4], 0
    %12 = vsyncpa [#allocation3], 0
    %13 = vsyncpa [#allocation7], 0
    // Predicated region
    $region2: #{tpu_custom_call.1} parent=1 // pred_check
      _
    $region3: #{tpu_custom_call.1} parent=1 // pred_check_branch
      %15 = sbr.rel (0) target = $region5
    $region4: #{tpu_custom_call.1} parent=1 // pred_region
      %s17 = ssub.s32 16, 16
      %18 = vsyncadd [#allocation4], %s17
      %21 = dma.hbm_to_smem %s0, 16, [#allocation2], [#allocation4]
    $region5: #{tpu_custom_call.1} parent=1 // pred_fallthru
      _
    // Predicated region
    $region6: #{tpu_custom_call.1} parent=1 // pred_check
      _
    $region7: #{tpu_custom_call.1} parent=1 // pred_check_branch
      %23 = sbr.rel (0) target = $region9
    $region8: #{tpu_custom_call.1} parent=1 // pred_region
      _
    $region9: #{tpu_custom_call.1} parent=1 // pred_fallthru
      _
    // Predicated region
    $region10: #{tpu_custom_call.1} parent=1 // pred_check
      _
    $region11: #{tpu_custom_call.1} parent=1 // pred_check_branch
      %25 = sbr.rel (0) target = $region13
    $region12: #{tpu_custom_call.1} parent=1 // pred_region
      _
    $region13: #{tpu_custom_call.1} parent=1 // pred_fallthru
      _
    // Predicated region
    $region14: #{tpu_custom_call.1} parent=1 // pred_check
      _
    $region15: #{tpu_custom_call.1} parent=1 // pred_check_branch
      %27 = sbr.rel (0) target = $region17
    $region16: #{tpu_custom_call.1} parent=1 // pred_region
      _
    $region17: #{tpu_custom_call.1} parent=1 // pred_fallthru
      _
    // Predicated region
    $region18: #{tpu_custom_call.1} parent=1 // pred_check
      _
    $region19: #{tpu_custom_call.1} parent=1 // pred_check_branch
      %29 = sbr.rel (0) target = $region21
    $region20: #{tpu_custom_call.1} parent=1 // pred_region
      %30 = dma.done [#allocation4], 16
    $region21: #{tpu_custom_call.1} parent=1 // pred_fallthru
      _
    %31 = sfence
    %s32 = sld [smem:[#allocation2]]
    %s33 = sld [smem:[#allocation2 + $0x1]]
    %s34 = sld [smem:[#allocation2 + $0x2]]
    %v35 = vld [vmem:[%s3] sm:$0xff]
    %v36 = vld [vmem:[%s1] sm:$0x1]
    %v38 = vlaneseq
    %v39 = vshrl.u32 %v38, 7
    %v40 = vsub.s32 0, %v39
    %v41 = vrot.slane %v36, %v40
    %v43 = vmul.f32 %v35, %v41
    %v44 = vld [vmem:[%s2] sm:$0x1]
    %v46 = vlaneseq
    %v47 = vshrl.u32 %v46, 7
    %v48 = vsub.s32 0, %v47
    %v49 = vrot.slane %v44, %v48
    %v51 = vadd.f32 %v43, %v49
    %vm52 = vcmask 130048
    %53 = vst.msk [vmem:[#allocation5] sm:$0xff] %vm52, %v51
    %v54 = vstv %s32
    %v55 = vsub.f32 %v51, %v54
    %v56 = vmul.f32 %v55, %v55
    %v57 = vsub.f32 0.0, %v56
    %v58 = vstv %s33
    %v59 = vmul.f32 %v57, %v58
    %v60 = vstv %s34
    %v61 = vadd.f32 %v59, %v60
    %62 = vst.msk [vmem:[#allocation6] sm:$0xff] %vm52, %v61
    // Predicated region
    $region22: #{tpu_custom_call.1} parent=1 // pred_check
      _
    $region23: #{tpu_custom_call.1} parent=1 // pred_check_branch
      %64 = sbr.rel (0) target = $region25
    $region24: #{tpu_custom_call.1} parent=1 // pred_region
      %s66 = ssub.s32 128, 128
      %67 = vsyncadd [#allocation3], %s66
      %s69 = sshll.u32 [#allocation5], 4
      %s70 = int_to_ptr.vmem [resolvable:$true] %s69
      %72 = dma.vmem_to_hbm [thread:$0]  %s70, 128, %s4, [#allocation3]
    $region25: #{tpu_custom_call.1} parent=1 // pred_fallthru
      _
    // Predicated region
    $region26: #{tpu_custom_call.1} parent=1 // pred_check
      _
    $region27: #{tpu_custom_call.1} parent=1 // pred_check_branch
      %74 = sbr.rel (0) target = $region29
    $region28: #{tpu_custom_call.1} parent=1 // pred_region
      %s76 = ssub.s32 128, 128
      %77 = vsyncadd [#allocation7], %s76
      %s79 = sshll.u32 [#allocation6], 4
      %s80 = int_to_ptr.vmem [resolvable:$true] %s79
      %82 = dma.vmem_to_hbm [thread:$0]  %s80, 128, %s5, [#allocation7]
    $region29: #{tpu_custom_call.1} parent=1 // pred_fallthru
      _
    // Predicated region
    $region30: #{tpu_custom_call.1} parent=1 // pred_check
      _
    $region31: #{tpu_custom_call.1} parent=1 // pred_check_branch
      %84 = sbr.rel (0) target = $region33
    $region32: #{tpu_custom_call.1} parent=1 // pred_region
      %85 = dma.done [#allocation3], 128
    $region33: #{tpu_custom_call.1} parent=1 // pred_fallthru
      _
    // Predicated region
    $region34: #{tpu_custom_call.1} parent=1 // pred_check
      _
    $region35: #{tpu_custom_call.1} parent=1 // pred_check_branch
      %87 = sbr.rel (0) target = $region37
    $region36: #{tpu_custom_call.1} parent=1 // pred_region
      %88 = dma.done [#allocation7], 128
    $region37: #{tpu_custom_call.1} parent=1 // pred_fallthru
      _
    %89 = vsyncpa [#allocation3], 1
    %90 = vsyncpa [#allocation7], 1
    %91 = vsyncpa [#allocation4], 1

</llo_original>
